<compile_context>
chip_gen: v7x
topology: tpu7x:2x2x1
jax: 0.10.0
libtpu: 0.0.40
codegen_flags: <defaults>
</compile_context>

<pallas_src>
import jax
import jax.numpy as jnp
from jax import lax
from jax.experimental import pallas as pl
from jax.experimental.pallas import tpu as pltpu


def _round_up(x, m):
    return ((x + m - 1) // m) * m


def _make_kernel(weighted, F_s, LBLK, LT, s_extent, lane_extent):
    need_row = (s_extent % F_s) != 0
    need_lane = (lane_extent % LBLK) != 0

    def kernel(*refs):
        if weighted:
            pred_ref, gt_ref, valid_ref, w_ref, loss_ref, cnt_ref = refs
        else:
            pred_ref, gt_ref, valid_ref, loss_ref, cnt_ref = refs
            w_ref = None

        p = pl.program_id(0)
        b = pl.program_id(1)
        f = pl.program_id(2)
        j = pl.program_id(3)

        # First step of this parallel group: zero the resident accumulators.
        @pl.when((b == 0) & (f == 0) & (j == 0))
        def _():
            loss_ref[...] = jnp.zeros_like(loss_ref)
            cnt_ref[...] = jnp.zeros_like(cnt_ref)

        v = valid_ref[...].astype(jnp.float32)                          # (F_s, LBLK)
        d = (gt_ref[...].astype(jnp.float32)
             - pred_ref[...].astype(jnp.float32)) * v                   # (F_s, LBLK)
        ad = jnp.abs(d)
        sl1 = jnp.where(ad < 1.0, 0.5 * d * d, ad - 0.5)                # SmoothL1, beta=1
        if weighted:
            sl1 = sl1 * w_ref[...]                                      # (1, LBLK) bcast over sublanes
        cnt = (v != 0.0).astype(jnp.float32)

        if need_row or need_lane:
            ok = None
            if need_row:
                rid = lax.broadcasted_iota(jnp.int32, (F_s, LBLK), 0)
                ok = rid < (s_extent - f * F_s)
            if need_lane:
                lid = lax.broadcasted_iota(jnp.int32, (F_s, LBLK), 1)
                lane_ok = lid < (lane_extent - (p * LT + j) * LBLK)
                ok = lane_ok if ok is None else (ok & lane_ok)
            # where-select (not multiply): OOB block contents may be Inf/NaN.
            sl1 = jnp.where(ok, sl1, 0.0)
            cnt = jnp.where(ok, cnt, 0.0)

        loss_ref[...] += sl1
        cnt_ref[...] += cnt

    return kernel


def supervised_pred_loss(data_batch, output_dict, use_weighted_loss, *,
                         tile_hw=8192, frames_per_block=32, parallel_groups=1):
    """Pallas implementation of SupervisedPredLoss.forward."""
    # ---- glue: same element pairing as the torch view/permute chain --------------
    pillar = output_dict["pillar_flow_output"]                  # (b, h, w, T*2)
    b, h, w, c2 = pillar.shape
    assert c2 % 2 == 0
    T = c2 // 2
    HW = h * w

    gt_flows = data_batch["gt_flows"]                           # (B0, S, h, w, 2)
    B0, S = gt_flows.shape[0], gt_flows.shape[1]
    assert b * T == B0 * S, "pred / gt frame counts must match"

    # Frame-major, channel-interleaved: (B0, S, 2*HW).  Only one XLA transpose (pred);
    # gt / valid are already in this memory order.
    pred = jnp.transpose(pillar.reshape(b, h, w, T, 2), (0, 3, 1, 2, 4))
    pred = pred.reshape(B0, S, 2 * HW)
    gt = gt_flows.reshape(B0, S, 2 * HW)

    valid = data_batch["gt_valid_maps"].reshape(B0, S, HW)
    # Interleave the per-pixel mask onto the channel-interleaved lane layout (compact).
    valid2 = jnp.repeat(valid.astype(jnp.bfloat16), 2, axis=-1)        # (B0, S, 2*HW)

    # ---- tiling ------------------------------------------------------------------
    if S <= frames_per_block or S < 32:
        F_s = S                       # block == full frame extent of a batch (always legal)
    else:
        F_s = max(32, (frames_per_block // 32) * 32)   # 32-aligned: legal for i8/bf16/f32

    elems_target = max(int(frames_per_block), 1) * max(int(tile_hw), 128)
    TILE = _round_up(max(1, -(-elems_target // F_s)), 128)     # pixels per lane tile
    TILE = max(128, min(TILE, _round_up(HW, 128)))
    LBLK = 2 * TILE                                            # interleaved lanes per block

    S_t = -(-S // F_s)
    L_total = -(-(2 * HW) // LBLK)
    P = parallel_groups if (parallel_groups > 1 and L_total % parallel_groups == 0) else 1
    LT = L_total // P
    grid = (P, B0, S_t, LT)

    data_spec = pl.BlockSpec((None, F_s, LBLK), lambda p, bb, f, j: (bb, f, p * LT + j))
    out_specs = (pl.BlockSpec((None, F_s, LBLK), lambda p, bb, f, j: (p, 0, 0)),
                 pl.BlockSpec((None, F_s, LBLK), lambda p, bb, f, j: (p, 0, 0)))
    out_shape = (jax.ShapeDtypeStruct((P, F_s, LBLK), jnp.float32),
                 jax.ShapeDtypeStruct((P, F_s, LBLK), jnp.float32))

    blk_bytes = F_s * LBLK * 4
    vmem_need = 2 * 2 * blk_bytes                      # pred + gt, double buffered
    vmem_need += 2 * F_s * LBLK * valid2.dtype.itemsize
    vmem_need += 2 * 2 * blk_bytes                     # the two resident accumulators
    vmem_need += 4 * LBLK * 4                          # weight row
    vmem_limit = int(min(max(int(vmem_need * 1.25), 32 * 2**20), 48 * 2**20))

    cparams = pltpu.CompilerParams(
        dimension_semantics=("parallel", "arbitrary", "arbitrary", "arbitrary"),
        vmem_limit_bytes=vmem_limit)

    n_elems = B0 * S * 2 * HW
    bytes_accessed = int((pred.dtype.itemsize + gt.dtype.itemsize) * n_elems
                         + valid2.size * valid2.dtype.itemsize
                         + 2 * P * F_s * LBLK * 4)
    cost = pl.CostEstimate(flops=12 * n_elems, transcendentals=0,
                           bytes_accessed=bytes_accessed)

    kernel = _make_kernel(use_weighted_loss, F_s, LBLK, LT, S, 2 * HW)

    if use_weighted_loss:
        inst = data_batch["gt_instance_maps"].reshape(B0, HW)
        wmap = jnp.where(inst == 0, jnp.float32(0.005),
                         jnp.where(inst > 0, jnp.float32(1.0), jnp.float32(0.0)))
        w_il = jnp.repeat(wmap, 2, axis=-1).reshape(B0, 1, 2 * HW)       # per-batch only
        w_spec = pl.BlockSpec((None, 1, LBLK), lambda p, bb, f, j: (bb, 0, p * LT + j))
        loss_part, cnt_part = pl.pallas_call(
            kernel,
            out_shape=out_shape,
            grid=grid,
            in_specs=[data_spec, data_spec, data_spec, w_spec],
            out_specs=out_specs,
            compiler_params=cparams,
            cost_estimate=cost,
        )(pred, gt, valid2, w_il)
    else:
        loss_part, cnt_part = pl.pallas_call(
            kernel,
            out_shape=out_shape,
            grid=grid,
            in_specs=[data_spec, data_spec, data_spec],
            out_specs=out_specs,
            compiler_params=cparams,
            cost_estimate=cost,
        )(pred, gt, valid2)

    # Each valid pixel was counted once per channel (interleaved) -> halve the count.
    # Matches torch: division yields NaN/Inf if there are zero valid pixels.
    loss_sum = jnp.sum(loss_part, dtype=jnp.float32)
    valid_cnt = 0.5 * jnp.sum(cnt_part, dtype=jnp.float32)
    return {"flow_loss": loss_sum / valid_cnt}


def reference_loss(data_batch, output_dict, use_weighted_loss):
    """Pure-JAX replication of the torch forward (for verification)."""
    pillar = output_dict["pillar_flow_output"]
    b, h, w, _ = pillar.shape
    pred = pillar.reshape(b, h, w, -1, 2)
    pred = jnp.transpose(pred, (0, 3, 4, 1, 2)).reshape(-1, 2, h, w)

    gt_flows = data_batch["gt_flows"]
    gt = gt_flows.reshape(-1, gt_flows.shape[2], gt_flows.shape[3], gt_flows.shape[4])
    gt = jnp.transpose(gt, (0, 3, 1, 2))

    valid = data_batch["gt_valid_maps"].reshape(-1, h, w)[:, None, :, :]
    valid_num = jnp.count_nonzero(valid)

    d = gt * valid - pred * valid
    ad = jnp.abs(d)
    sl1 = jnp.where(ad < 1.0, 0.5 * d * d, ad - 0.5)

    if use_weighted_loss:
        inst = data_batch["gt_instance_maps"]
        weight = jnp.where(inst == 0, 0.005, jnp.where(inst > 0, 1.0, 0.0))
        weight = weight[:, None, None, :, :]                   # (B0, 1, 1, h, w)
        B0 = inst.shape[0]
        lf = sl1.reshape(B0, -1, 1, h, w)
        return jnp.sum(lf * weight) / valid_num
    else:
        return jnp.sum(sl1) / valid_num


if __name__ == "__main__":
    # No learned parameters in this module (only the constant weight vector [0.005, 1.0]).
    key = jax.random.PRNGKey(0)
    ok = True
    # Configs exercise: (1) F_s == S (small S), (2) multi lane-tiles + lane mask + P=2,
    # (3) S > 32 so the frame axis has a partial block (row mask).
    configs = [
        # (B0, S,  H,  W,  tile_hw, frames_per_block, parallel_groups)
        (2, 3, 16, 16, 8192, 32, 1),
        (2, 8, 20, 20, 128, 8, 2),
        (2, 40, 16, 16, 8192, 32, 1),
    ]
    for (B0, S, H, W, tile, fpb, pg) in configs:
        k1, k2, k3, k4, key = jax.random.split(key, 5)
        pillar_flow_output = jax.random.normal(k1, (B0, H, W, S * 2), dtype=jnp.float32)
        gt_flows = jax.random.normal(k2, (B0, S, H, W, 2), dtype=jnp.float32)
        gt_valid_maps = (jax.random.uniform(k3, (B0, S, H, W)) > 0.3).astype(jnp.float32)
        gt_instance_maps = jax.random.randint(k4, (B0, H, W), 0, 4).astype(jnp.float32)

        data_batch = {
            "gt_flows": gt_flows,
            "gt_valid_maps": gt_valid_maps,
            "gt_instance_maps": gt_instance_maps,
        }
        output_dict = {"pillar_flow_output": pillar_flow_output}

        for use_weighted in (True, False):
            out = supervised_pred_loss(data_batch, output_dict, use_weighted,
                                       tile_hw=tile, frames_per_block=fpb,
                                       parallel_groups=pg)
            loss = jax.block_until_ready(out["flow_loss"])
            ref = reference_loss(data_batch, output_dict, use_weighted)
            if not jnp.allclose(loss, ref, rtol=2e-4, atol=1e-6):
                ok = False
                print("MISMATCH", (B0, S, H, W, tile, fpb, pg), use_weighted,
                      float(loss), float(ref))

    if ok:
        print("KERNEL_OK")
</pallas_src>

<mosaic_0001>
module attributes {stable_mosaic.version = 11 : i64} {
  func.func @kernel(%arg0: i32, %arg1: i32, %arg2: i32, %arg3: i32, %arg4: memref<1x3x512xf32, #tpu.memory_space<vmem>>, %arg5: memref<1x3x512xf32, #tpu.memory_space<vmem>>, %arg6: memref<1x3x512xbf16, #tpu.memory_space<vmem>>, %arg7: memref<1x1x512xf32, #tpu.memory_space<vmem>>, %arg8: memref<1x3x512xf32, #tpu.memory_space<vmem>>, %arg9: memref<1x3x512xf32, #tpu.memory_space<vmem>>) attributes {dimension_semantics = [#tpu.dimension_semantics<parallel>, #tpu.dimension_semantics<arbitrary>, #tpu.dimension_semantics<arbitrary>, #tpu.dimension_semantics<arbitrary>], iteration_bounds = array<i64: 1, 2, 1, 1>, scalar_prefetch = 0 : i64, scratch_operands = 0 : i64, tpu.core_type = #tpu.core_type<tc>, window_params = [{transform_indices = @transform_0, window_bounds = array<i64: 1, 3, 512>}, {transform_indices = @transform_1, window_bounds = array<i64: 1, 3, 512>}, {transform_indices = @transform_2, window_bounds = array<i64: 1, 3, 512>}, {transform_indices = @transform_3, window_bounds = array<i64: 1, 1, 512>}, {transform_indices = @transform_4, window_bounds = array<i64: 1, 3, 512>}, {transform_indices = @transform_5, window_bounds = array<i64: 1, 3, 512>}]} {
    %c0_i32 = arith.constant 0 : i32
    %0 = arith.cmpi eq, %arg1, %c0_i32 : i32
    %c0_i32_0 = arith.constant 0 : i32
    %1 = arith.cmpi eq, %arg2, %c0_i32_0 : i32
    %2 = arith.andi %0, %1 : i1
    %c0_i32_1 = arith.constant 0 : i32
    %3 = arith.cmpi eq, %arg3, %c0_i32_1 : i32
    %4 = arith.andi %2, %3 : i1
    %5 = arith.extui %4 : i1 to i32
    %c0_i32_2 = arith.constant 0 : i32
    %6 = arith.cmpi ne, %5, %c0_i32_2 : i32
    scf.if %6 {
      %cst_29 = arith.constant 0.000000e+00 : f32
      %45 = vector.broadcast %cst_29 : f32 to vector<3x512xf32>
      %c0_30 = arith.constant 0 : index
      %c0_31 = arith.constant 0 : index
      %c0_32 = arith.constant 0 : index
      %46 = vector.load %arg8[%c0_30, %c0_31, %c0_32] : memref<1x3x512xf32, #tpu.memory_space<vmem>>, vector<1x3x512xf32>
      %47 = vector.shape_cast %46 : vector<1x3x512xf32> to vector<3x512xf32>
      %48 = vector.shape_cast %45 : vector<3x512xf32> to vector<1x3x512xf32>
      tpu.vector_store %arg8[%c0_30, %c0_31, %c0_32], %48 {strides = array<i32>} : memref<1x3x512xf32, #tpu.memory_space<vmem>>, vector<1x3x512xf32>,
      %cst_33 = arith.constant 0.000000e+00 : f32
      %49 = vector.broadcast %cst_33 : f32 to vector<3x512xf32>
      %c0_34 = arith.constant 0 : index
      %c0_35 = arith.constant 0 : index
      %c0_36 = arith.constant 0 : index
      %50 = vector.load %arg9[%c0_34, %c0_35, %c0_36] : memref<1x3x512xf32, #tpu.memory_space<vmem>>, vector<1x3x512xf32>
      %51 = vector.shape_cast %50 : vector<1x3x512xf32> to vector<3x512xf32>
      %52 = vector.shape_cast %49 : vector<3x512xf32> to vector<1x3x512xf32>
      tpu.vector_store %arg9[%c0_34, %c0_35, %c0_36], %52 {strides = array<i32>} : memref<1x3x512xf32, #tpu.memory_space<vmem>>, vector<1x3x512xf32>,
    } else {
    }
    %c0 = arith.constant 0 : index
    %c0_3 = arith.constant 0 : index
    %c0_4 = arith.constant 0 : index
    %7 = vector.load %arg6[%c0, %c0_3, %c0_4] : memref<1x3x512xbf16, #tpu.memory_space<vmem>>, vector<1x3x512xbf16>
    %8 = vector.shape_cast %7 : vector<1x3x512xbf16> to vector<3x512xbf16>
    %9 = arith.extf %8 : vector<3x512xbf16> to vector<3x512xf32>
    %c0_5 = arith.constant 0 : index
    %c0_6 = arith.constant 0 : index
    %c0_7 = arith.constant 0 : index
    %10 = vector.load %arg5[%c0_5, %c0_6, %c0_7] : memref<1x3x512xf32, #tpu.memory_space<vmem>>, vector<1x3x512xf32>
    %11 = vector.shape_cast %10 : vector<1x3x512xf32> to vector<3x512xf32>
    %c0_8 = arith.constant 0 : index
    %c0_9 = arith.constant 0 : index
    %c0_10 = arith.constant 0 : index
    %12 = vector.load %arg4[%c0_8, %c0_9, %c0_10] : memref<1x3x512xf32, #tpu.memory_space<vmem>>, vector<1x3x512xf32>
    %13 = vector.shape_cast %12 : vector<1x3x512xf32> to vector<3x512xf32>
    %14 = arith.subf %11, %13 : vector<3x512xf32>
    %15 = arith.mulf %14, %9 : vector<3x512xf32>
    %16 = math.absf %15 : vector<3x512xf32>
    %cst = arith.constant 1.000000e+00 : f32
    %17 = vector.broadcast %cst : f32 to vector<3x512xf32>
    %18 = arith.cmpf olt, %16, %17 : vector<3x512xf32>
    %cst_11 = arith.constant 5.000000e-01 : f32
    %19 = vector.broadcast %cst_11 : f32 to vector<3x512xf32>
    %20 = arith.mulf %19, %15 : vector<3x512xf32>
    %21 = arith.mulf %20, %15 : vector<3x512xf32>
    %cst_12 = arith.constant 5.000000e-01 : f32
    %22 = vector.broadcast %cst_12 : f32 to vector<3x512xf32>
    %23 = arith.subf %16, %22 : vector<3x512xf32>
    %24 = arith.select %18, %21, %23 : vector<3x512xi1>, vector<3x512xf32>
    %c0_13 = arith.constant 0 : index
    %c0_14 = arith.constant 0 : index
    %c0_15 = arith.constant 0 : index
    %25 = vector.load %arg7[%c0_13, %c0_14, %c0_15] : memref<1x1x512xf32, #tpu.memory_space<vmem>>, vector<1x1x512xf32>
    %26 = vector.shape_cast %25 : vector<1x1x512xf32> to vector<1x512xf32>
    %27 = vector.broadcast %26 : vector<1x512xf32> to vector<3x512xf32>
    %28 = arith.mulf %24, %27 : vector<3x512xf32>
    %cst_16 = arith.constant 0.000000e+00 : f32
    %29 = vector.broadcast %cst_16 : f32 to vector<3x512xf32>
    %30 = arith.cmpf one, %9, %29 : vector<3x512xf32>
    %31 = arith.extui %30 : vector<3x512xi1> to vector<3x512xi32>
    %32 = arith.sitofp %31 : vector<3x512xi32> to vector<3x512xf32>
    %c0_17 = arith.constant 0 : index
    %c0_18 = arith.constant 0 : index
    %c0_19 = arith.constant 0 : index
    %33 = vector.load %arg8[%c0_17, %c0_18, %c0_19] : memref<1x3x512xf32, #tpu.memory_space<vmem>>, vector<1x3x512xf32>
    %34 = vector.shape_cast %33 : vector<1x3x512xf32> to vector<3x512xf32>
    %35 = arith.addf %34, %28 : vector<3x512xf32>
    %c0_20 = arith.constant 0 : index
    %c0_21 = arith.constant 0 : index
    %c0_22 = arith.constant 0 : index
    %36 = vector.load %arg8[%c0_20, %c0_21, %c0_22] : memref<1x3x512xf32, #tpu.memory_space<vmem>>, vector<1x3x512xf32>
    %37 = vector.shape_cast %36 : vector<1x3x512xf32> to vector<3x512xf32>
    %38 = vector.shape_cast %35 : vector<3x512xf32> to vector<1x3x512xf32>
    tpu.vector_store %arg8[%c0_20, %c0_21, %c0_22], %38 {strides = array<i32>} : memref<1x3x512xf32, #tpu.memory_space<vmem>>, vector<1x3x512xf32>,
    %c0_23 = arith.constant 0 : index
    %c0_24 = arith.constant 0 : index
    %c0_25 = arith.constant 0 : index
    %39 = vector.load %arg9[%c0_23, %c0_24, %c0_25] : memref<1x3x512xf32, #tpu.memory_space<vmem>>, vector<1x3x512xf32>
    %40 = vector.shape_cast %39 : vector<1x3x512xf32> to vector<3x512xf32>
    %41 = arith.addf %40, %32 : vector<3x512xf32>
    %c0_26 = arith.constant 0 : index
    %c0_27 = arith.constant 0 : index
    %c0_28 = arith.constant 0 : index
    %42 = vector.load %arg9[%c0_26, %c0_27, %c0_28] : memref<1x3x512xf32, #tpu.memory_space<vmem>>, vector<1x3x512xf32>
    %43 = vector.shape_cast %42 : vector<1x3x512xf32> to vector<3x512xf32>
    %44 = vector.shape_cast %41 : vector<3x512xf32> to vector<1x3x512xf32>
    tpu.vector_store %arg9[%c0_26, %c0_27, %c0_28], %44 {strides = array<i32>} : memref<1x3x512xf32, #tpu.memory_space<vmem>>, vector<1x3x512xf32>,
    return
  }
  func.func @transform_0(%arg0: i32, %arg1: i32, %arg2: i32, %arg3: i32) -> (i32, i32, i32) {
    %c1_i32 = arith.constant 1 : i32
    %0 = arith.muli %arg0, %c1_i32 : i32
    %1 = arith.addi %0, %arg3 : i32
    %c0_i32 = arith.constant 0 : i32
    return %arg1, %arg2, %1 : i32, i32, i32
  }
  func.func @transform_1(%arg0: i32, %arg1: i32, %arg2: i32, %arg3: i32) -> (i32, i32, i32) {
    %c1_i32 = arith.constant 1 : i32
    %0 = arith.muli %arg0, %c1_i32 : i32
    %1 = arith.addi %0, %arg3 : i32
    %c0_i32 = arith.constant 0 : i32
    return %arg1, %arg2, %1 : i32, i32, i32
  }
  func.func @transform_2(%arg0: i32, %arg1: i32, %arg2: i32, %arg3: i32) -> (i32, i32, i32) {
    %c1_i32 = arith.constant 1 : i32
    %0 = arith.muli %arg0, %c1_i32 : i32
    %1 = arith.addi %0, %arg3 : i32
    %c0_i32 = arith.constant 0 : i32
    return %arg1, %arg2, %1 : i32, i32, i32
  }
  func.func @transform_3(%arg0: i32, %arg1: i32, %arg2: i32, %arg3: i32) -> (i32, i32, i32) {
    %c1_i32 = arith.constant 1 : i32
    %0 = arith.muli %arg0, %c1_i32 : i32
    %1 = arith.addi %0, %arg3 : i32
    %c0_i32 = arith.constant 0 : i32
    %c0_i32_0 = arith.constant 0 : i32
    return %arg1, %c0_i32, %1 : i32, i32, i32
  }
  func.func @transform_4(%arg0: i32, %arg1: i32, %arg2: i32, %arg3: i32) -> (i32, i32, i32) {
    %c0_i32 = arith.constant 0 : i32
    %c0_i32_0 = arith.constant 0 : i32
    %c0_i32_1 = arith.constant 0 : i32
    return %arg0, %c0_i32, %c0_i32_0 : i32, i32, i32
  }
  func.func @transform_5(%arg0: i32, %arg1: i32, %arg2: i32, %arg3: i32) -> (i32, i32, i32) {
    %c0_i32 = arith.constant 0 : i32
    %c0_i32_0 = arith.constant 0 : i32
    %c0_i32_1 = arith.constant 0 : i32
    return %arg0, %c0_i32, %c0_i32_0 : i32, i32, i32
  }
}

</mosaic_0001>

<llo_original>
// kernel: tpu_custom_call.1
$region0: #{tpu_custom_call.1}
  #allocation0 [shape = 'u32[]', space=smem, size = 0x4, offset = 0x4, fixed_abs, tag = 'smem constant byte address 0x4 - core index']
  #allocation1 [shape = 'u32[144,128]{1,0:T(1,128)}', space=vmem, size = 0x12000, scoped, tag = 'internal scratch']
  %s0 = inlined_call_operand.vmem [shape: f32[2,3,512], index: 0, kind: input, shape index: {}]
  %s1 = inlined_call_operand.vmem [shape: f32[2,3,512], index: 1, kind: input, shape index: {}]
  %s2 = inlined_call_operand.vmem [shape: bf16[2,3,512], index: 2, kind: input, shape index: {}]
  %s3 = inlined_call_operand.vmem [shape: f32[2,1,512], index: 3, kind: input, shape index: {}]
  %s4 = inlined_call_operand.vmem [shape: f32[1,3,512], index: 4, kind: output, shape index: {0}]
  %s5 = inlined_call_operand.vmem [shape: f32[1,3,512], index: 5, kind: output, shape index: {1}]
  %6 = xla_tuple %s4, %s5
  %s7 = sld [smem:[#allocation0]]
  $region61: #{tpu_custom_call.1} parent=0
    _
  %s9 = ssub.s32 1, %s7
  %s10 = scalar_select 0, %s9, %s7
  loop: start=0, step=1, limit=4
  $region2: #{tpu_custom_call.1} parent=0 // loop_pre_header
    _
  $region3: #{tpu_custom_call.1} parent=0 // loop_header
    %s12 = sphi 0, %s16
    %p13 = scmp.ge.s32.totalorder %s12, 4
    %s19 = sphi 0, %s45
    %s20 = sphi 0, %s41
    %s21 = sphi 0, %s37
    %s22 = sphi 0, %s33
    %s23 = sphi 0, %s19
    %s24 = sphi 0, %s20
    %s25 = sphi 0, %s21
    %s26 = sphi 0, %s22
    %s27 = sphi 0, %s23
    %s28 = sphi 0, %s24
    %s29 = sphi 0, %s25
    %s30 = sphi 0, %s26
    %s54 = sphi 0, %s56
    %s57 = sphi 0, %s54
    %s58 = sphi 0, %s57
    %s74 = sphi 0, %s58
    %s86 = sphi 0, %s88
    %s89 = sphi 0, %s86
    %s90 = sphi 0, %s89
    %s106 = sphi 0, %s90
    %s118 = sphi 0, %s120
    %s121 = sphi 0, %s118
    %s122 = sphi 0, %s121
    %s138 = sphi 0, %s122
    %s148 = sphi 0, %s150
    %s151 = sphi 0, %s148
    %s152 = sphi 0, %s151
    %s168 = sphi 0, %s152
    %s174 = sphi 0, %s176
    %s177 = sphi 0, %s174
    %s178 = sphi 0, %s177
    %s194 = sphi 0, %s178
    %s200 = sphi 0, %s202
    %s203 = sphi 0, %s200
    %s204 = sphi 0, %s203
    %s220 = sphi 0, %s204
  $region4: #{tpu_custom_call.1} parent=0 // loop_header_branch
    %15 = sbr.rel (%p13) target = $region8
  $region5: #{tpu_custom_call.1} parent=0 // loop_body
    %s17 = ssub.s32 %s12, 1
    %s18 = ssub.s32 %s12, 2
    %s31 = sadd.s32 1, %s22
    %p32 = scmp.ge.s32.totalorder %s31, 1
    %s33 = scalar_select %p32, 0, %s31
    %s34 = sadd.s32 1, %s21
    %s35 = scalar_select %p32, %s34, %s21
    %p36 = scmp.ge.s32.totalorder %s35, 1
    %s37 = scalar_select %p36, 0, %s35
    %s38 = sadd.s32 1, %s20
    %s39 = scalar_select %p36, %s38, %s20
    %p40 = scmp.ge.s32.totalorder %s39, 2
    %s41 = scalar_select %p40, 0, %s39
    %s42 = sadd.s32 1, %s19
    %s43 = scalar_select %p40, %s42, %s19
    %p44 = scmp.ge.s32.totalorder %s43, 1
    %s45 = scalar_select %p44, 0, %s43
    %s46 = sadd.s32 %s19, %s22
    %s47 = sadd.s32 %s45, %s33
    %s48 = ssub.s32 %s20, %s41
    %s49 = ssub.s32 %s21, %s37
    %s50 = sor.u32 %s48, %s49
    %s51 = ssub.s32 %s46, %s47
    %s52 = sor.u32 %s50, %s51
    %p53 = scmp.eq.s32.totalorder %s52, 0
    %s55 = sadd.s32 %s54, 1
    %s56 = scalar_select %p53, %s54, %s55
    %p59 = pneg %p53
    %p60 = scmp.eq.s32.totalorder %s12, 1
    %p61 = por %p59, %p60
    %p62 = scmp.ne.s32.totalorder %s54, %s57
    %p63 = scmp.eq.s32.totalorder %s12, 0
    %p64 = por %p62, %p63
    %p65 = scmp.ne.s32.totalorder %s54, %s57
    %p66 = scmp.eq.s32.totalorder %s17, 1
    %p67 = por %p65, %p66
    %p68 = scmp.ne.s32.totalorder %s57, %s58
    %p69 = scmp.eq.s32.totalorder %s17, 0
    %p70 = por %p68, %p69
    %p71 = scmp.ne.s32.totalorder %s57, %s58
    %p72 = scmp.eq.s32.totalorder %s18, 1
    %p73 = por %p71, %p72
    %p75 = scmp.ne.s32.totalorder %s58, %s74
    %p76 = scmp.eq.s32.totalorder %s18, 0
    %p77 = por %p75, %p76
    %s78 = sadd.s32 %s19, %s22
    %s79 = sadd.s32 %s45, %s33
    %s80 = ssub.s32 %s20, %s41
    %s81 = ssub.s32 %s21, %s37
    %s82 = sor.u32 %s80, %s81
    %s83 = ssub.s32 %s78, %s79
    %s84 = sor.u32 %s82, %s83
    %p85 = scmp.eq.s32.totalorder %s84, 0
    %s87 = sadd.s32 %s86, 1
    %s88 = scalar_select %p85, %s86, %s87
    %p91 = pneg %p85
    %p92 = scmp.eq.s32.totalorder %s12, 1
    %p93 = por %p91, %p92
    %p94 = scmp.ne.s32.totalorder %s86, %s89
    %p95 = scmp.eq.s32.totalorder %s12, 0
    %p96 = por %p94, %p95
    %p97 = scmp.ne.s32.totalorder %s86, %s89
    %p98 = scmp.eq.s32.totalorder %s17, 1
    %p99 = por %p97, %p98
    %p100 = scmp.ne.s32.totalorder %s89, %s90
    %p101 = scmp.eq.s32.totalorder %s17, 0
    %p102 = por %p100, %p101
    %p103 = scmp.ne.s32.totalorder %s89, %s90
    %p104 = scmp.eq.s32.totalorder %s18, 1
    %p105 = por %p103, %p104
    %p107 = scmp.ne.s32.totalorder %s90, %s106
    %p108 = scmp.eq.s32.totalorder %s18, 0
    %p109 = por %p107, %p108
    %s110 = sadd.s32 %s19, %s22
    %s111 = sadd.s32 %s45, %s33
    %s112 = ssub.s32 %s20, %s41
    %s113 = ssub.s32 %s21, %s37
    %s114 = sor.u32 %s112, %s113
    %s115 = ssub.s32 %s110, %s111
    %s116 = sor.u32 %s114, %s115
    %p117 = scmp.eq.s32.totalorder %s116, 0
    %s119 = sadd.s32 %s118, 1
    %s120 = scalar_select %p117, %s118, %s119
    %p123 = pneg %p117
    %p124 = scmp.eq.s32.totalorder %s12, 1
    %p125 = por %p123, %p124
    %p126 = scmp.ne.s32.totalorder %s118, %s121
    %p127 = scmp.eq.s32.totalorder %s12, 0
    %p128 = por %p126, %p127
    %p129 = scmp.ne.s32.totalorder %s118, %s121
    %p130 = scmp.eq.s32.totalorder %s17, 1
    %p131 = por %p129, %p130
    %p132 = scmp.ne.s32.totalorder %s121, %s122
    %p133 = scmp.eq.s32.totalorder %s17, 0
    %p134 = por %p132, %p133
    %p135 = scmp.ne.s32.totalorder %s121, %s122
    %p136 = scmp.eq.s32.totalorder %s18, 1
    %p137 = por %p135, %p136
    %p139 = scmp.ne.s32.totalorder %s122, %s138
    %p140 = scmp.eq.s32.totalorder %s18, 0
    %p141 = por %p139, %p140
    %s142 = sadd.s32 %s19, %s22
    %s143 = sadd.s32 %s45, %s33
    %s144 = ssub.s32 %s20, %s41
    %s145 = ssub.s32 %s142, %s143
    %s146 = sor.u32 %s144, %s145
    %p147 = scmp.eq.s32.totalorder %s146, 0
    %s149 = sadd.s32 %s148, 1
    %s150 = scalar_select %p147, %s148, %s149
    %p153 = pneg %p147
    %p154 = scmp.eq.s32.totalorder %s12, 1
    %p155 = por %p153, %p154
    %p156 = scmp.ne.s32.totalorder %s148, %s151
    %p157 = scmp.eq.s32.totalorder %s12, 0
    %p158 = por %p156, %p157
    %p159 = scmp.ne.s32.totalorder %s148, %s151
    %p160 = scmp.eq.s32.totalorder %s17, 1
    %p161 = por %p159, %p160
    %p162 = scmp.ne.s32.totalorder %s151, %s152
    %p163 = scmp.eq.s32.totalorder %s17, 0
    %p164 = por %p162, %p163
    %p165 = scmp.ne.s32.totalorder %s151, %s152
    %p166 = scmp.eq.s32.totalorder %s18, 1
    %p167 = por %p165, %p166
    %p169 = scmp.ne.s32.totalorder %s152, %s168
    %p170 = scmp.eq.s32.totalorder %s18, 0
    %p171 = por %p169, %p170
    %s172 = ssub.s32 %s19, %s45
    %p173 = scmp.eq.s32.totalorder %s172, 0
    %s175 = sadd.s32 %s174, 1
    %s176 = scalar_select %p173, %s174, %s175
    %p179 = pneg %p173
    %p180 = scmp.eq.s32.totalorder %s12, 1
    %p181 = por %p179, %p180
    %p182 = scmp.ne.s32.totalorder %s174, %s177
    %p183 = scmp.eq.s32.totalorder %s12, 0
    %p184 = por %p182, %p183
    %p185 = scmp.ne.s32.totalorder %s174, %s177
    %p186 = scmp.eq.s32.totalorder %s17, 1
    %p187 = por %p185, %p186
    %p188 = scmp.ne.s32.totalorder %s177, %s178
    %p189 = scmp.eq.s32.totalorder %s17, 0
    %p190 = por %p188, %p189
    %p191 = scmp.ne.s32.totalorder %s177, %s178
    %p192 = scmp.eq.s32.totalorder %s18, 1
    %p193 = por %p191, %p192
    %p195 = scmp.ne.s32.totalorder %s178, %s194
    %p196 = scmp.eq.s32.totalorder %s18, 0
    %p197 = por %p195, %p196
    %s198 = ssub.s32 %s19, %s45
    %p199 = scmp.eq.s32.totalorder %s198, 0
    %s201 = sadd.s32 %s200, 1
    %s202 = scalar_select %p199, %s200, %s201
    %p205 = pneg %p199
    %p206 = scmp.eq.s32.totalorder %s12, 1
    %p207 = por %p205, %p206
    %p208 = scmp.ne.s32.totalorder %s200, %s203
    %p209 = scmp.eq.s32.totalorder %s12, 0
    %p210 = por %p208, %p209
    %p211 = scmp.ne.s32.totalorder %s200, %s203
    %p212 = scmp.eq.s32.totalorder %s17, 1
    %p213 = por %p211, %p212
    %p214 = scmp.ne.s32.totalorder %s203, %s204
    %p215 = scmp.eq.s32.totalorder %s17, 0
    %p216 = por %p214, %p215
    %p217 = scmp.ne.s32.totalorder %s203, %s204
    %p218 = scmp.eq.s32.totalorder %s18, 1
    %p219 = por %p217, %p218
    %p221 = scmp.ne.s32.totalorder %s204, %s220
    %p222 = scmp.eq.s32.totalorder %s18, 0
    %p223 = por %p221, %p222
    %p224 = scmp.le.s32.totalorder 1, %s12
    %p225 = scmp.lt.s32.totalorder %s12, 3
    %p226 = pnand %p224, %p225
    %p227 = pneg %p226
    // Predicated region
    $region9: #{tpu_custom_call.1} parent=5 // pred_check
      _
    $region10: #{tpu_custom_call.1} parent=5 // pred_check_branch
      %229 = sbr.rel (%p226) target = $region12
    $region11: #{tpu_custom_call.1} parent=5 // pred_region
      %s230 = ssub.s32 %s12, 1
    $region12: #{tpu_custom_call.1} parent=5 // pred_fallthru
      _
    %p231 = scmp.lt.s32.totalorder %s12, 2
    // Predicated region
    $region13: #{tpu_custom_call.1} parent=5 // pred_check
      %p232 = pneg %p231
    $region14: #{tpu_custom_call.1} parent=5 // pred_check_branch
      %234 = sbr.rel (%p232) target = $region16
    $region15: #{tpu_custom_call.1} parent=5 // pred_region
      // Predicated region
      $region17: #{tpu_custom_call.1} parent=15 // pred_check
        %p235 = pneg %p64
      $region18: #{tpu_custom_call.1} parent=15 // pred_check_branch
        %237 = sbr.rel (%p235) target = $region20
      $region19: #{tpu_custom_call.1} parent=15 // pred_region
        %s238 = sadd.s32 %s19, %s22
        %s239 = smul.u32 4, %s238
        %p240 = scmp.lt.s32.totalorder %s20, 1
        %s241 = scalar_select %p240, %s20, 1
        %p242 = scmp.lt.s32.totalorder %s21, 0
        %s243 = scalar_select %p242, %s21, 0
        %p244 = scmp.lt.s32.totalorder %s239, 3
        %s245 = scalar_select %p244, %s239, 3
        %s246 = smul.addr %s243, 4
        %s247 = sadd.s32 %s245, %s246
        %s248 = smul.addr %s241, 4
        %s249 = sadd.s32 %s247, %s248
        %s250 = smul.addr %s249, 4
        %s251 = scalar_lea.vmem %s0, %s250
        %s252 = sadd.s32 %s19, %s22
        %s253 = smul.u32 4, %s252
      $region20: #{tpu_custom_call.1} parent=15 // pred_fallthru
        _
      // Predicated region
      $region21: #{tpu_custom_call.1} parent=15 // pred_check
        %p254 = pneg %p96
      $region22: #{tpu_custom_call.1} parent=15 // pred_check_branch
        %256 = sbr.rel (%p254) target = $region24
      $region23: #{tpu_custom_call.1} parent=15 // pred_region
        %s257 = sadd.s32 %s19, %s22
        %s258 = smul.u32 4, %s257
        %p259 = scmp.lt.s32.totalorder %s20, 1
        %s260 = scalar_select %p259, %s20, 1
        %p261 = scmp.lt.s32.totalorder %s21, 0
        %s262 = scalar_select %p261, %s21, 0
        %p263 = scmp.lt.s32.totalorder %s258, 3
        %s264 = scalar_select %p263, %s258, 3
        %s265 = smul.addr %s262, 4
        %s266 = sadd.s32 %s264, %s265
        %s267 = smul.addr %s260, 4
        %s268 = sadd.s32 %s266, %s267
        %s269 = smul.addr %s268, 4
        %s270 = scalar_lea.vmem %s1, %s269
        %s271 = sadd.s32 %s19, %s22
        %s272 = smul.u32 4, %s271
      $region24: #{tpu_custom_call.1} parent=15 // pred_fallthru
        _
      // Predicated region
      $region25: #{tpu_custom_call.1} parent=15 // pred_check
        %p273 = pneg %p128
      $region26: #{tpu_custom_call.1} parent=15 // pred_check_branch
        %275 = sbr.rel (%p273) target = $region28
      $region27: #{tpu_custom_call.1} parent=15 // pred_region
        %s276 = sadd.s32 %s19, %s22
        %s277 = smul.u32 4, %s276
        %p278 = scmp.lt.s32.totalorder %s20, 1
        %s279 = scalar_select %p278, %s20, 1
        %p280 = scmp.lt.s32.totalorder %s21, 0
        %s281 = scalar_select %p280, %s21, 0
        %p282 = scmp.lt.s32.totalorder %s277, 3
        %s283 = scalar_select %p282, %s277, 3
        %s284 = smul.addr %s281, 4
        %s285 = sadd.s32 %s283, %s284
        %s286 = smul.addr %s279, 4
        %s287 = sadd.s32 %s285, %s286
        %s288 = smul.addr %s287, 2
        %s289 = scalar_lea.vmem %s2, %s288
        %s290 = sadd.s32 %s19, %s22
        %s291 = smul.u32 4, %s290
      $region28: #{tpu_custom_call.1} parent=15 // pred_fallthru
        _
      // Predicated region
      $region29: #{tpu_custom_call.1} parent=15 // pred_check
        %p292 = pneg %p158
      $region30: #{tpu_custom_call.1} parent=15 // pred_check_branch
        %294 = sbr.rel (%p292) target = $region32
      $region31: #{tpu_custom_call.1} parent=15 // pred_region
        %s295 = sadd.s32 %s19, %s22
        %s296 = smul.u32 4, %s295
        %p297 = scmp.lt.s32.totalorder %s20, 1
        %s298 = scalar_select %p297, %s20, 1
        %p299 = scmp.lt.s32.totalorder %s296, 3
        %s300 = scalar_select %p299, %s296, 3
        %s301 = smul.addr %s298, 4
        %s302 = sadd.s32 %s300, %s301
        %s303 = scalar_lea.vmem %s3, %s302
        %s304 = sadd.s32 %s19, %s22
        %s305 = smul.u32 4, %s304
      $region32: #{tpu_custom_call.1} parent=15 // pred_fallthru
        _
    $region16: #{tpu_custom_call.1} parent=5 // pred_fallthru
      _
    %p306 = scmp.le.s32.totalorder 1, %s12
    %p307 = scmp.lt.s32.totalorder %s12, 3
    %p308 = pnand %p306, %p307
    %p309 = pneg %p308
    // Predicated region
    $region33: #{tpu_custom_call.1} parent=5 // pred_check
      _
    $region34: #{tpu_custom_call.1} parent=5 // pred_check_branch
      %311 = sbr.rel (%p308) target = $region36
    $region35: #{tpu_custom_call.1} parent=5 // pred_region
      %s312 = ssub.s32 %s12, 1
      %s313 = sadd.s32 %s23, %s26
      %s314 = smul.u32 4, %s313
      %p315 = scmp.lt.s32.totalorder %s24, 1
      %s316 = scalar_select %p315, %s24, 1
      %p317 = scmp.lt.s32.totalorder %s25, 0
      %s318 = scalar_select %p317, %s25, 0
      %p319 = scmp.lt.s32.totalorder %s314, 3
      %s320 = scalar_select %p319, %s314, 3
      %s321 = smul.addr %s318, 4
      %s322 = sadd.s32 %s320, %s321
      %s323 = smul.addr %s316, 4
      %s324 = sadd.s32 %s322, %s323
      %s325 = smul.addr %s324, 4
      %s326 = scalar_lea.vmem %s0, %s325
      %p327 = pneg %p70
      %p328 = pneg %p67
      %s329 = sadd.s32 %s23, %s26
      %s330 = smul.u32 4, %s329
      %p331 = scmp.lt.s32.totalorder %s24, 1
      %s332 = scalar_select %p331, %s24, 1
      %p333 = scmp.lt.s32.totalorder %s25, 0
      %s334 = scalar_select %p333, %s25, 0
      %p335 = scmp.lt.s32.totalorder %s330, 3
      %s336 = scalar_select %p335, %s330, 3
      %s337 = smul.addr %s334, 4
      %s338 = sadd.s32 %s336, %s337
      %s339 = smul.addr %s332, 4
      %s340 = sadd.s32 %s338, %s339
      %s341 = smul.addr %s340, 4
      %s342 = scalar_lea.vmem %s1, %s341
      %p343 = pneg %p102
      %p344 = pneg %p99
      %s345 = sadd.s32 %s23, %s26
      %s346 = smul.u32 4, %s345
      %p347 = scmp.lt.s32.totalorder %s24, 1
      %s348 = scalar_select %p347, %s24, 1
      %p349 = scmp.lt.s32.totalorder %s25, 0
      %s350 = scalar_select %p349, %s25, 0
      %p351 = scmp.lt.s32.totalorder %s346, 3
      %s352 = scalar_select %p351, %s346, 3
      %s353 = smul.addr %s350, 4
      %s354 = sadd.s32 %s352, %s353
      %s355 = smul.addr %s348, 4
      %s356 = sadd.s32 %s354, %s355
      %s357 = smul.addr %s356, 2
      %s358 = scalar_lea.vmem %s2, %s357
      %p359 = pneg %p134
      %p360 = pneg %p131
      %s361 = sadd.s32 %s23, %s26
      %s362 = smul.u32 4, %s361
      %p363 = scmp.lt.s32.totalorder %s24, 1
      %s364 = scalar_select %p363, %s24, 1
      %p365 = scmp.lt.s32.totalorder %s362, 3
      %s366 = scalar_select %p365, %s362, 3
      %s367 = smul.addr %s364, 4
      %s368 = sadd.s32 %s366, %s367
      %s369 = scalar_lea.vmem %s3, %s368
      %p370 = pneg %p164
      %p371 = pneg %p161
      %p372 = pneg %p190
      %p373 = pneg %p187
      %p374 = scmp.lt.s32.totalorder %s23, 0
      %s375 = scalar_select %p374, %s23, 0
      %s376 = smul.addr %s375, 4
      %s377 = smul.addr %s376, 4
      %s378 = scalar_lea.vmem %s4, %s377
      %p379 = pneg %p216
      %p380 = pneg %p213
      %p381 = scmp.lt.s32.totalorder %s23, 0
      %s382 = scalar_select %p381, %s23, 0
      %s383 = smul.addr %s382, 4
      %s384 = smul.addr %s383, 4
      %s385 = scalar_lea.vmem %s5, %s384
      %s386 = sadd.s32 %s23, %s26
      %s387 = smul.u32 4, %s386
      %p388 = scmp.lt.s32.totalorder %s24, 1
      %s389 = scalar_select %p388, %s24, 1
      %p390 = scmp.lt.s32.totalorder %s25, 0
      %s391 = scalar_select %p390, %s25, 0
      %p392 = scmp.lt.s32.totalorder %s387, 3
      %s393 = scalar_select %p392, %s387, 3
      %s394 = smul.addr %s391, 4
      %s395 = sadd.s32 %s393, %s394
      %s396 = smul.addr %s389, 4
      %s397 = sadd.s32 %s395, %s396
      %s398 = smul.addr %s397, 4
      %s399 = scalar_lea.vmem %s0, %s398
      %s400 = sadd.s32 %s23, %s26
      %s401 = smul.u32 4, %s400
      %s402 = sadd.s32 %s23, %s26
      %s403 = smul.u32 4, %s402
      %p404 = scmp.lt.s32.totalorder %s24, 1
      %s405 = scalar_select %p404, %s24, 1
      %p406 = scmp.lt.s32.totalorder %s25, 0
      %s407 = scalar_select %p406, %s25, 0
      %p408 = scmp.lt.s32.totalorder %s403, 3
      %s409 = scalar_select %p408, %s403, 3
      %s410 = smul.addr %s407, 4
      %s411 = sadd.s32 %s409, %s410
      %s412 = smul.addr %s405, 4
      %s413 = sadd.s32 %s411, %s412
      %s414 = smul.addr %s413, 4
      %s415 = scalar_lea.vmem %s1, %s414
      %s416 = sadd.s32 %s23, %s26
      %s417 = smul.u32 4, %s416
      %s418 = sadd.s32 %s23, %s26
      %s419 = smul.u32 4, %s418
      %p420 = scmp.lt.s32.totalorder %s24, 1
      %s421 = scalar_select %p420, %s24, 1
      %p422 = scmp.lt.s32.totalorder %s25, 0
      %s423 = scalar_select %p422, %s25, 0
      %p424 = scmp.lt.s32.totalorder %s419, 3
      %s425 = scalar_select %p424, %s419, 3
      %s426 = smul.addr %s423, 4
      %s427 = sadd.s32 %s425, %s426
      %s428 = smul.addr %s421, 4
      %s429 = sadd.s32 %s427, %s428
      %s430 = smul.addr %s429, 2
      %s431 = scalar_lea.vmem %s2, %s430
      %s432 = sadd.s32 %s23, %s26
      %s433 = smul.u32 4, %s432
      %s434 = sadd.s32 %s23, %s26
      %s435 = smul.u32 4, %s434
      %p436 = scmp.lt.s32.totalorder %s24, 1
      %s437 = scalar_select %p436, %s24, 1
      %p438 = scmp.lt.s32.totalorder %s435, 3
      %s439 = scalar_select %p438, %s435, 3
      %s440 = smul.addr %s437, 4
      %s441 = sadd.s32 %s439, %s440
      %s442 = scalar_lea.vmem %s3, %s441
      %s443 = sadd.s32 %s23, %s26
      %s444 = smul.u32 4, %s443
      %p445 = scmp.lt.s32.totalorder %s23, 0
      %s446 = scalar_select %p445, %s23, 0
      %s447 = smul.addr %s446, 4
      %s448 = smul.addr %s447, 4
      %s449 = scalar_lea.vmem %s4, %s448
      %p450 = scmp.lt.s32.totalorder %s23, 0
      %s451 = scalar_select %p450, %s23, 0
      %s452 = smul.addr %s451, 4
      %s453 = smul.addr %s452, 4
      %s454 = scalar_lea.vmem %s5, %s453
      %p455 = scmp.eq.s32.totalorder %s24, 0
      %p456 = scmp.eq.s32.totalorder %s25, 0
      %p457 = pnand %p455, %p456
      %p458 = pneg %p457
      %p459 = scmp.eq.s32.totalorder %s26, 0
      %p460 = pnand %p458, %p459
      %p461 = pneg %p460
      // Predicated region
      $region37: #{tpu_custom_call.1} parent=35 // pred_check
        _
      $region38: #{tpu_custom_call.1} parent=35 // pred_check_branch
        %463 = sbr.rel (%p460) target = $region40
      $region39: #{tpu_custom_call.1} parent=35 // pred_region
        %464 = vst [vmem:[%s449] sm:$0x77] 0.0
        %465 = vst [vmem:[%s449 + $0x8] sm:$0x77] 0.0
        %466 = vst [vmem:[%s454] sm:$0x77] 0.0
        %467 = vst [vmem:[%s454 + $0x8] sm:$0x77] 0.0
      $region40: #{tpu_custom_call.1} parent=35 // pred_fallthru
        _
      %v468 = vld [vmem:[%s431] sm:$0xff]
      %v469 = vunpack.c.l.bf16 %v468
      %v470 = vunpack.c.h.bf16 %v468
      %v471 = vld [vmem:[%s415] sm:$0x77]
      %v472 = vld [vmem:[%s415 + $0x8] sm:$0x77]
      %v473 = vld [vmem:[%s399] sm:$0x77]
      %v474 = vld [vmem:[%s399 + $0x8] sm:$0x77]
      %v475 = vsub.f32 %v471, %v473
      %v476 = vsub.f32 %v472, %v474
      %v477 = vmul.f32 %v475, %v469
      %v478 = vmul.f32 %v476, %v470
      %v479 = vand.u32 2147483647, %v477
      %v480 = vand.u32 2147483647, %v478
      %vm481 = vcmp.lt.f32.partialorder %v479, 1.0
      %vm482 = vcmp.lt.f32.partialorder %v480, 1.0
      %v483 = vmul.f32 %v477, 0.5
      %v484 = vmul.f32 %v478, 0.5
      %v485 = vmul.f32 %v483, %v477
      %v486 = vmul.f32 %v484, %v478
      %v487 = vsub.f32 %v479, 0.5
      %v488 = vsub.f32 %v480, 0.5
      %v489 = vsel %vm481, %v485, %v487
      %v490 = vsel %vm482, %v486, %v488
      %v491 = vld [vmem:[%s442] sm:$0xf]
      %v493 = vlaneseq
      %v494 = vshrl.u32 %v493, 7
      %v495 = vsub.s32 0, %v494
      %v496 = vrot.slane %v491, %v495
      %v497 = vlaneseq
      %v498 = vshrl.u32 %v497, 7
      %v499 = vsub.s32 1, %v498
      %v500 = vrot.slane %v491, %v499
      %v501 = vlaneseq
      %v502 = vshrl.u32 %v501, 7
      %v503 = vsub.s32 2, %v502
      %v504 = vrot.slane %v491, %v503
      %v505 = vlaneseq
      %v506 = vshrl.u32 %v505, 7
      %v507 = vsub.s32 3, %v506
      %v508 = vrot.slane %v491, %v507
      %v509 = vcombine.low %v496, %v500
      %v510 = vcombine.low %v504, %v508
      %v513 = vmul.f32 %v489, %v509
      %v514 = vmul.f32 %v490, %v510
      %vm515 = vcmp.ne.f32.partialorder %v469, 0.0
      %vm516 = vcmp.ne.f32.partialorder %v470, 0.0
      %v517 = vsel %vm515, 1, 0
      %v518 = vsel %vm516, 1, 0
      %v519 = vcvt.s32.f32 %v517
      %v520 = vcvt.s32.f32 %v518
      %v521 = vld [vmem:[%s449] sm:$0x77]
      %v522 = vld [vmem:[%s449 + $0x8] sm:$0x77]
      %v523 = vadd.f32 %v521, %v513
      %v524 = vadd.f32 %v522, %v514
      %525 = vst [vmem:[%s449] sm:$0x77] %v523
      %526 = vst [vmem:[%s449 + $0x8] sm:$0x77] %v524
      %v527 = vld [vmem:[%s454] sm:$0x77]
      %v528 = vld [vmem:[%s454 + $0x8] sm:$0x77]
      %v529 = vadd.f32 %v527, %v519
      %v530 = vadd.f32 %v528, %v520
      %531 = vst [vmem:[%s454] sm:$0x77] %v529
      %532 = vst [vmem:[%s454 + $0x8] sm:$0x77] %v530
      %p533 = scmp.lt.s32.totalorder %s23, 0
      %s534 = scalar_select %p533, %s23, 0
      %s535 = smul.addr %s534, 4
      %s536 = smul.addr %s535, 4
      %s537 = scalar_lea.vmem %s4, %s536
      %p538 = scmp.lt.s32.totalorder %s23, 0
      %s539 = scalar_select %p538, %s23, 0
      %s540 = smul.addr %s539, 4
      %s541 = smul.addr %s540, 4
      %s542 = scalar_lea.vmem %s5, %s541
      // Predicated region
      $region41: #{tpu_custom_call.1} parent=35 // pred_check
        %p543 = pneg %p187
      $region42: #{tpu_custom_call.1} parent=35 // pred_check_branch
        %545 = sbr.rel (%p543) target = $region44
      $region43: #{tpu_custom_call.1} parent=35 // pred_region
        _
      $region44: #{tpu_custom_call.1} parent=35 // pred_fallthru
        _
      // Predicated region
      $region45: #{tpu_custom_call.1} parent=35 // pred_check
        %p546 = pneg %p213
      $region46: #{tpu_custom_call.1} parent=35 // pred_check_branch
        %548 = sbr.rel (%p546) target = $region48
      $region47: #{tpu_custom_call.1} parent=35 // pred_region
        _
      $region48: #{tpu_custom_call.1} parent=35 // pred_fallthru
        _
      // Predicated region
      $region49: #{tpu_custom_call.1} parent=35 // pred_check
        %p549 = pneg %p187
      $region50: #{tpu_custom_call.1} parent=35 // pred_check_branch
        %551 = sbr.rel (%p549) target = $region52
      $region51: #{tpu_custom_call.1} parent=35 // pred_region
        %p552 = scmp.lt.s32.totalorder %s23, 0
        %s553 = scalar_select %p552, %s23, 0
        %s554 = smul.addr %s553, 4
        %s555 = smul.addr %s554, 4
        %s556 = scalar_lea.vmem %s4, %s555
      $region52: #{tpu_custom_call.1} parent=35 // pred_fallthru
        _
      // Predicated region
      $region53: #{tpu_custom_call.1} parent=35 // pred_check
        %p557 = pneg %p213
      $region54: #{tpu_custom_call.1} parent=35 // pred_check_branch
        %559 = sbr.rel (%p557) target = $region56
      $region55: #{tpu_custom_call.1} parent=35 // pred_region
        %p560 = scmp.lt.s32.totalorder %s23, 0
        %s561 = scalar_select %p560, %s23, 0
        %s562 = smul.addr %s561, 4
        %s563 = smul.addr %s562, 4
        %s564 = scalar_lea.vmem %s5, %s563
      $region56: #{tpu_custom_call.1} parent=35 // pred_fallthru
        _
    $region36: #{tpu_custom_call.1} parent=5 // pred_fallthru
      _
    %p565 = scmp.le.s32.totalorder 2, %s12
    // Predicated region
    $region57: #{tpu_custom_call.1} parent=5 // pred_check
      %p566 = pneg %p565
    $region58: #{tpu_custom_call.1} parent=5 // pred_check_branch
      %568 = sbr.rel (%p566) target = $region60
    $region59: #{tpu_custom_call.1} parent=5 // pred_region
      %s569 = ssub.s32 %s12, 2
    $region60: #{tpu_custom_call.1} parent=5 // pred_fallthru
      _
  $region6: #{tpu_custom_call.1} parent=0 // loop_footer
    %s16 = sadd.s32 1, %s12
  $region7: #{tpu_custom_call.1} parent=0 // loop_footer_branch
    %11 = sbr.rel target = $region3
  $region8: #{tpu_custom_call.1} parent=0 // loop_exit
    _

</llo_original>
